<compile_context>
chip_gen: v7x
topology: tpu7x:2x2x1
jax: 0.10.0
libtpu: 0.0.40
codegen_flags: <defaults>
</compile_context>

<pallas_src>
import jax
import jax.numpy as jnp
from jax.experimental import pallas as pl
from jax.experimental.pallas import tpu as pltpu

NEG_SLOPE = 0.01   # nn.LeakyReLU default negative_slope
BN_EPS = 1e-5      # nn.BatchNorm1d default eps


def _leaky_relu(v):
    # Valid only for 0 < slope < 1: max(v, slope*v) == LeakyReLU(v).
    return jnp.maximum(v, NEG_SLOPE * v)


def _round_up(x, m):
    return ((x + m - 1) // m) * m


# --------------------------------------------------------------------------
# Kernel (batch on the lane axis; all tensors are transposed: (feat, batch))
# --------------------------------------------------------------------------
def qnet_kernel(xt_ref,
                w1_ref, b1_ref,        # fused layer1 (block-diag, BN folded), (48,F)/(48,1)
                wf_ref, b2v_ref,       # fused [layer1_2vm | layer2-x1-part], (32,48)/(16,1)
                w2b_ref, b2_ref,       # layer2 x2-part, (16,16)/(16,1)
                w3_ref, b3_ref,        # layer3, (a_dim,16)/(a_dim,1)
                out_ref):
    # bf16 matmul operands, f32 accumulation, f32 elementwise.
    xb = xt_ref[...].astype(jnp.bfloat16)                           # (F, TB)

    # layer1_task + layer1_1vm as one block-diagonal matmul.
    # h1 rows 0..15 == x1^T, rows 16..47 == vm stage-1 activations^T.
    h1 = _leaky_relu(
        jnp.dot(w1_ref[...], xb, preferred_element_type=jnp.float32)
        + b1_ref[...])                                              # (48, TB)
    h1b = h1.astype(jnp.bfloat16)

    # ONE MXU pass over h1 for both h1-consuming matmuls:
    #   rows 0..15  = (x2_stage1 @ W2v)^T        (layer1_2vm pre-activation)
    #   rows 16..31 = (x1 @ W2[:16,:])^T         (layer2 x1 contribution)
    hf = jnp.dot(wf_ref[...], h1b, preferred_element_type=jnp.float32)  # (32, TB)

    x2 = _leaky_relu(hf[0:16, :] + b2v_ref[...])                    # (16, TB)

    # layer2: (x1 @ W2_top)^T + W2_bot^T @ x2^T + b2
    h2 = _leaky_relu(
        hf[16:32, :]
        + jnp.dot(w2b_ref[...], x2.astype(jnp.bfloat16),
                  preferred_element_type=jnp.float32)
        + b2_ref[...])                                              # (16, TB)

    # layer3: plain Linear(16, a_dim), transposed.
    out_ref[...] = (
        jnp.dot(w3_ref[...], h2.astype(jnp.bfloat16),
                preferred_element_type=jnp.float32)
        + b3_ref[...])                                              # (a_dim, TB)


# --------------------------------------------------------------------------
# Parameter construction / folding (wrapper side)
# --------------------------------------------------------------------------
def init_params(key, s_task_dim, s_vm_dim, a_dim):
    """Deterministic synthetic raw parameters (PyTorch-like, weights (in, out))."""
    ks = iter(jax.random.split(key, 40))

    def lin(in_d, out_d):
        bound = 1.0 / jnp.sqrt(in_d)
        w = jax.random.uniform(next(ks), (in_d, out_d), jnp.float32, -bound, bound)
        b = jax.random.uniform(next(ks), (out_d,), jnp.float32, -bound, bound)
        return w, b

    def bn(n):
        gamma = 1.0 + 0.1 * jax.random.normal(next(ks), (n,), jnp.float32)
        beta = 0.1 * jax.random.normal(next(ks), (n,), jnp.float32)
        mean = 0.05 * jax.random.normal(next(ks), (n,), jnp.float32)
        var = jnp.abs(1.0 + 0.1 * jax.random.normal(next(ks), (n,), jnp.float32))
        return (gamma, beta, mean, var)

    p = {}
    p['w1t'], p['b1t'] = lin(s_task_dim, 16); p['bn1t'] = bn(16)
    p['w1v'], p['b1v'] = lin(s_vm_dim, 32);   p['bn1v'] = bn(32)
    p['w2v'], p['b2v'] = lin(32, 16);         p['bn2v'] = bn(16)
    p['w2'],  p['b2']  = lin(32, 16);         p['bn2']  = bn(16)
    p['w3'],  p['b3']  = lin(16, a_dim)
    return p


def _fold_bn_into_linear(w, b, gamma, beta, mean, var):
    """Linear -> BN(eval) folded: W' = W*scale, b' = b*scale + shift."""
    scale = gamma / jnp.sqrt(var + BN_EPS)
    shift = beta - mean * scale
    return w * scale[None, :], b * scale + shift


def pack_params(p, s_task_dim):
    """Fold BN, fuse + transpose weights for the lane-batch orientation, cast to bf16."""
    w1t, b1t = _fold_bn_into_linear(p['w1t'], p['b1t'], *p['bn1t'])
    w1v, b1v = _fold_bn_into_linear(p['w1v'], p['b1v'], *p['bn1v'])
    w2v, b2v = _fold_bn_into_linear(p['w2v'], p['b2v'], *p['bn2v'])
    w2,  b2  = _fold_bn_into_linear(p['w2'],  p['b2'],  *p['bn2'])
    w3,  b3  = p['w3'], p['b3']

    F = p['w1t'].shape[0] + p['w1v'].shape[0]

    # Fused block-diagonal first layer, transposed: (48, F).
    w1T = jnp.zeros((48, F), jnp.float32)
    w1T = w1T.at[:16, :s_task_dim].set(w1t.T)
    w1T = w1T.at[16:, s_task_dim:].set(w1v.T)
    b1 = jnp.concatenate([b1t, b1v])[:, None]                 # (48, 1)

    # Fused [layer1_2vm | layer2 x1-part], transposed: (32, 48).
    #   rows 0..15 contract the vm half of h1 (rows 16..47),
    #   rows 16..31 contract x1 (h1 rows 0..15).
    wf = jnp.zeros((32, 48), jnp.float32)
    wf = wf.at[:16, 16:48].set(w2v.T)
    wf = wf.at[16:32, :16].set(w2[:16, :].T)

    w2b = w2[16:, :].T                                        # (16, 16)
    w3T = w3.T                                                # (a_dim, 16)

    bf = jnp.bfloat16
    return {'w1': w1T.astype(bf), 'b1': b1,
            'wf': wf.astype(bf), 'b2v': b2v[:, None],
            'w2b': w2b.astype(bf), 'b2': b2[:, None],
            'w3': w3T.astype(bf), 'b3': b3[:, None]}


_KARG_ORDER = ('w1', 'b1', 'wf', 'b2v', 'w2b', 'b2', 'w3', 'b3')


# --------------------------------------------------------------------------
# Wrapper (batch on lane axis, grid over batch, weights VMEM-resident)
# --------------------------------------------------------------------------
def qnet_forward(x, kparams, *, block_b=4096):
    B, F = x.shape
    a_dim = kparams['w3'].shape[0]
    x_t = x.T                                                 # (F, B): batch -> lanes

    # Lane-axis tile: multiple of 128 (or the whole batch if B isn't).
    if B % 128 == 0:
        tb = min(block_b, B)
        if B >= 256:
            # v7x: keep >=2 grid steps so ("parallel",) shards across both TCs.
            tb = min(tb, _round_up(pl.cdiv(B, 2), 128))
        tb = max(128, (tb // 128) * 128)
    else:
        tb = B
    grid = (pl.cdiv(B, tb),)

    def _resident_spec(shape):
        nd = len(shape)
        return pl.BlockSpec(shape, lambda i, _nd=nd: (0,) * _nd)

    weight_args = [kparams[k] for k in _KARG_ORDER]
    in_specs = ([pl.BlockSpec((F, tb), lambda i: (0, i))]
                + [_resident_spec(w.shape) for w in weight_args])
    out_specs = pl.BlockSpec((a_dim, tb), lambda i: (0, i))

    out_t = pl.pallas_call(
        qnet_kernel,
        out_shape=jax.ShapeDtypeStruct((a_dim, B), jnp.float32),
        grid=grid,
        in_specs=in_specs,
        out_specs=out_specs,
        compiler_params=pltpu.CompilerParams(
            dimension_semantics=("parallel",)),
    )(x_t, *weight_args)
    return out_t.T                                            # back to (B, a_dim)


# --------------------------------------------------------------------------
# Pure-JAX f32 reference (matches PyTorch eval-mode forward, unfolded params)
# --------------------------------------------------------------------------
def qnet_reference(x, p, s_task_dim):
    def lrelu(v):
        return jnp.where(v >= 0, v, NEG_SLOPE * v)

    def bn(y, stats):
        g, b, m, v = stats
        return (y - m) / jnp.sqrt(v + BN_EPS) * g + b

    xt, xv = x[:, :s_task_dim], x[:, s_task_dim:]
    x1 = lrelu(bn(xt @ p['w1t'] + p['b1t'], p['bn1t']))
    x2 = lrelu(bn(xv @ p['w1v'] + p['b1v'], p['bn1v']))
    x2 = lrelu(bn(x2 @ p['w2v'] + p['b2v'], p['bn2v']))
    h = jnp.concatenate([x1, x2], axis=1)
    h = lrelu(bn(h @ p['w2'] + p['b2'], p['bn2']))
    return h @ p['w3'] + p['b3']


if __name__ == "__main__":
    S_TASK, S_VM, A_DIM, BATCH = 8, 24, 4, 256   # B=256 -> tb=128, grid=(2,)

    key = jax.random.PRNGKey(0)
    k_x, k_p = jax.random.split(key)
    x = jax.random.normal(k_x, (BATCH, S_TASK + S_VM), jnp.float32)

    raw = init_params(k_p, S_TASK, S_VM, A_DIM)
    kparams = pack_params(raw, S_TASK)

    out = qnet_forward(x, kparams)
    out = jax.block_until_ready(out)

    ref = qnet_reference(x, raw, S_TASK)
    assert out.shape == (BATCH, A_DIM)
    # Tolerance accounts for deliberate bf16 matmul operands (f32 accumulation).
    assert jnp.allclose(out, ref, atol=5e-2, rtol=5e-2), (
        float(jnp.max(jnp.abs(out - ref))))

    print("KERNEL_OK")
</pallas_src>

<mosaic_0001>
module attributes {stable_mosaic.version = 11 : i64} {
  func.func @qnet_kernel(%arg0: i32, %arg1: memref<32x128xf32, #tpu.memory_space<vmem>>, %arg2: memref<48x32xbf16, #tpu.memory_space<vmem>>, %arg3: memref<48x1xf32, #tpu.memory_space<vmem>>, %arg4: memref<32x48xbf16, #tpu.memory_space<vmem>>, %arg5: memref<16x1xf32, #tpu.memory_space<vmem>>, %arg6: memref<16x16xbf16, #tpu.memory_space<vmem>>, %arg7: memref<16x1xf32, #tpu.memory_space<vmem>>, %arg8: memref<4x16xbf16, #tpu.memory_space<vmem>>, %arg9: memref<4x1xf32, #tpu.memory_space<vmem>>, %arg10: memref<4x128xf32, #tpu.memory_space<vmem>>) attributes {dimension_semantics = [#tpu.dimension_semantics<parallel>], iteration_bounds = array<i64: 2>, scalar_prefetch = 0 : i64, scratch_operands = 0 : i64, tpu.core_type = #tpu.core_type<tc>, window_params = [{transform_indices = @transform_0, window_bounds = array<i64: 32, 128>}, {pipeline_mode = #tpu.pipeline_mode<synchronous>, transform_indices = @transform_1, window_bounds = array<i64: 48, 32>}, {pipeline_mode = #tpu.pipeline_mode<synchronous>, transform_indices = @transform_2, window_bounds = array<i64: 48, 1>}, {pipeline_mode = #tpu.pipeline_mode<synchronous>, transform_indices = @transform_3, window_bounds = array<i64: 32, 48>}, {pipeline_mode = #tpu.pipeline_mode<synchronous>, transform_indices = @transform_4, window_bounds = array<i64: 16, 1>}, {pipeline_mode = #tpu.pipeline_mode<synchronous>, transform_indices = @transform_5, window_bounds = array<i64: 16, 16>}, {pipeline_mode = #tpu.pipeline_mode<synchronous>, transform_indices = @transform_6, window_bounds = array<i64: 16, 1>}, {pipeline_mode = #tpu.pipeline_mode<synchronous>, transform_indices = @transform_7, window_bounds = array<i64: 4, 16>}, {pipeline_mode = #tpu.pipeline_mode<synchronous>, transform_indices = @transform_8, window_bounds = array<i64: 4, 1>}, {transform_indices = @transform_9, window_bounds = array<i64: 4, 128>}]} {
    %c0 = arith.constant 0 : index
    %c0_0 = arith.constant 0 : index
    %0 = vector.load %arg1[%c0, %c0_0] : memref<32x128xf32, #tpu.memory_space<vmem>>, vector<32x128xf32>
    %1 = arith.truncf %0 : vector<32x128xf32> to vector<32x128xbf16>
    %c0_1 = arith.constant 0 : index
    %c0_2 = arith.constant 0 : index
    %2 = vector.load %arg2[%c0_1, %c0_2] : memref<48x32xbf16, #tpu.memory_space<vmem>>, vector<48x32xbf16>
    %cst = arith.constant dense<0.000000e+00> : vector<48x128xf32>
    %3 = tpu.matmul %2, %1, %cst {dimension_numbers = #tpu.dot_dimension_numbers<[1], [0], [0], [1], [0, 0, 1, 1], [], []>} : vector<48x32xbf16>, vector<32x128xbf16>, vector<48x128xf32> -> vector<48x128xf32>
    %c0_3 = arith.constant 0 : index
    %c0_4 = arith.constant 0 : index
    %4 = vector.load %arg3[%c0_3, %c0_4] : memref<48x1xf32, #tpu.memory_space<vmem>>, vector<48x1xf32>
    %5 = vector.broadcast %4 : vector<48x1xf32> to vector<48x128xf32>
    %6 = arith.addf %3, %5 : vector<48x128xf32>
    %cst_5 = arith.constant 0.00999999977 : f32
    %7 = vector.broadcast %cst_5 : f32 to vector<48x128xf32>
    %8 = arith.mulf %7, %6 : vector<48x128xf32>
    %9 = arith.maximumf %6, %8 : vector<48x128xf32>
    %10 = arith.truncf %9 : vector<48x128xf32> to vector<48x128xbf16>
    %c0_6 = arith.constant 0 : index
    %c0_7 = arith.constant 0 : index
    %11 = vector.load %arg4[%c0_6, %c0_7] : memref<32x48xbf16, #tpu.memory_space<vmem>>, vector<32x48xbf16>
    %cst_8 = arith.constant dense<0.000000e+00> : vector<32x128xf32>
    %12 = tpu.matmul %11, %10, %cst_8 {dimension_numbers = #tpu.dot_dimension_numbers<[1], [0], [0], [1], [0, 0, 1, 1], [], []>} : vector<32x48xbf16>, vector<48x128xbf16>, vector<32x128xf32> -> vector<32x128xf32>
    %13 = vector.extract_strided_slice %12 {offsets = [0, 0], sizes = [16, 128], strides = [1, 1]} : vector<32x128xf32> to vector<16x128xf32>
    %c0_9 = arith.constant 0 : index
    %c0_10 = arith.constant 0 : index
    %14 = vector.load %arg5[%c0_9, %c0_10] : memref<16x1xf32, #tpu.memory_space<vmem>>, vector<16x1xf32>
    %15 = vector.broadcast %14 : vector<16x1xf32> to vector<16x128xf32>
    %16 = arith.addf %13, %15 : vector<16x128xf32>
    %cst_11 = arith.constant 0.00999999977 : f32
    %17 = vector.broadcast %cst_11 : f32 to vector<16x128xf32>
    %18 = arith.mulf %17, %16 : vector<16x128xf32>
    %19 = arith.maximumf %16, %18 : vector<16x128xf32>
    %20 = vector.extract_strided_slice %12 {offsets = [16, 0], sizes = [16, 128], strides = [1, 1]} : vector<32x128xf32> to vector<16x128xf32>
    %c0_12 = arith.constant 0 : index
    %c0_13 = arith.constant 0 : index
    %21 = vector.load %arg6[%c0_12, %c0_13] : memref<16x16xbf16, #tpu.memory_space<vmem>>, vector<16x16xbf16>
    %22 = arith.truncf %19 : vector<16x128xf32> to vector<16x128xbf16>
    %cst_14 = arith.constant dense<0.000000e+00> : vector<16x128xf32>
    %23 = tpu.matmul %21, %22, %cst_14 {dimension_numbers = #tpu.dot_dimension_numbers<[1], [0], [0], [1], [0, 0, 1, 1], [], []>} : vector<16x16xbf16>, vector<16x128xbf16>, vector<16x128xf32> -> vector<16x128xf32>
    %24 = arith.addf %20, %23 : vector<16x128xf32>
    %c0_15 = arith.constant 0 : index
    %c0_16 = arith.constant 0 : index
    %25 = vector.load %arg7[%c0_15, %c0_16] : memref<16x1xf32, #tpu.memory_space<vmem>>, vector<16x1xf32>
    %26 = vector.broadcast %25 : vector<16x1xf32> to vector<16x128xf32>
    %27 = arith.addf %24, %26 : vector<16x128xf32>
    %cst_17 = arith.constant 0.00999999977 : f32
    %28 = vector.broadcast %cst_17 : f32 to vector<16x128xf32>
    %29 = arith.mulf %28, %27 : vector<16x128xf32>
    %30 = arith.maximumf %27, %29 : vector<16x128xf32>
    %c0_18 = arith.constant 0 : index
    %c0_19 = arith.constant 0 : index
    %31 = vector.load %arg8[%c0_18, %c0_19] : memref<4x16xbf16, #tpu.memory_space<vmem>>, vector<4x16xbf16>
    %32 = arith.truncf %30 : vector<16x128xf32> to vector<16x128xbf16>
    %cst_20 = arith.constant dense<0.000000e+00> : vector<4x128xf32>
    %33 = tpu.matmul %31, %32, %cst_20 {dimension_numbers = #tpu.dot_dimension_numbers<[1], [0], [0], [1], [0, 0, 1, 1], [], []>} : vector<4x16xbf16>, vector<16x128xbf16>, vector<4x128xf32> -> vector<4x128xf32>
    %c0_21 = arith.constant 0 : index
    %c0_22 = arith.constant 0 : index
    %34 = vector.load %arg9[%c0_21, %c0_22] : memref<4x1xf32, #tpu.memory_space<vmem>>, vector<4x1xf32>
    %35 = vector.broadcast %34 : vector<4x1xf32> to vector<4x128xf32>
    %36 = arith.addf %33, %35 : vector<4x128xf32>
    %c0_23 = arith.constant 0 : index
    %c0_24 = arith.constant 0 : index
    %37 = vector.load %arg10[%c0_23, %c0_24] : memref<4x128xf32, #tpu.memory_space<vmem>>, vector<4x128xf32>
    tpu.vector_store %arg10[%c0_23, %c0_24], %36 {strides = array<i32>} : memref<4x128xf32, #tpu.memory_space<vmem>>, vector<4x128xf32>,
    return
  }
  func.func @transform_0(%arg0: i32) -> (i32, i32) {
    %c0_i32 = arith.constant 0 : i32
    %c0_i32_0 = arith.constant 0 : i32
    return %c0_i32, %arg0 : i32, i32
  }
  func.func @transform_1(%arg0: i32) -> (i32, i32) {
    %c0_i32 = arith.constant 0 : i32
    %c0_i32_0 = arith.constant 0 : i32
    %c0_i32_1 = arith.constant 0 : i32
    return %c0_i32, %c0_i32_0 : i32, i32
  }
  func.func @transform_2(%arg0: i32) -> (i32, i32) {
    %c0_i32 = arith.constant 0 : i32
    %c0_i32_0 = arith.constant 0 : i32
    %c0_i32_1 = arith.constant 0 : i32
    return %c0_i32, %c0_i32_0 : i32, i32
  }
  func.func @transform_3(%arg0: i32) -> (i32, i32) {
    %c0_i32 = arith.constant 0 : i32
    %c0_i32_0 = arith.constant 0 : i32
    %c0_i32_1 = arith.constant 0 : i32
    return %c0_i32, %c0_i32_0 : i32, i32
  }
  func.func @transform_4(%arg0: i32) -> (i32, i32) {
    %c0_i32 = arith.constant 0 : i32
    %c0_i32_0 = arith.constant 0 : i32
    %c0_i32_1 = arith.constant 0 : i32
    return %c0_i32, %c0_i32_0 : i32, i32
  }
  func.func @transform_5(%arg0: i32) -> (i32, i32) {
    %c0_i32 = arith.constant 0 : i32
    %c0_i32_0 = arith.constant 0 : i32
    %c0_i32_1 = arith.constant 0 : i32
    return %c0_i32, %c0_i32_0 : i32, i32
  }
  func.func @transform_6(%arg0: i32) -> (i32, i32) {
    %c0_i32 = arith.constant 0 : i32
    %c0_i32_0 = arith.constant 0 : i32
    %c0_i32_1 = arith.constant 0 : i32
    return %c0_i32, %c0_i32_0 : i32, i32
  }
  func.func @transform_7(%arg0: i32) -> (i32, i32) {
    %c0_i32 = arith.constant 0 : i32
    %c0_i32_0 = arith.constant 0 : i32
    %c0_i32_1 = arith.constant 0 : i32
    return %c0_i32, %c0_i32_0 : i32, i32
  }
  func.func @transform_8(%arg0: i32) -> (i32, i32) {
    %c0_i32 = arith.constant 0 : i32
    %c0_i32_0 = arith.constant 0 : i32
    %c0_i32_1 = arith.constant 0 : i32
    return %c0_i32, %c0_i32_0 : i32, i32
  }
  func.func @transform_9(%arg0: i32) -> (i32, i32) {
    %c0_i32 = arith.constant 0 : i32
    %c0_i32_0 = arith.constant 0 : i32
    return %c0_i32, %arg0 : i32, i32
  }
}

</mosaic_0001>

<llo_original>
// kernel: tpu_custom_call.1
$region0: #{tpu_custom_call.1}
  #allocation0 [shape = 'u32[]', space=smem, size = 0x4, offset = 0x4, fixed_abs, tag = 'smem constant byte address 0x4 - core index']
  #allocation1 [shape = 'u32[144,128]{1,0:T(1,128)}', space=vmem, size = 0x12000, scoped, tag = 'internal scratch']
  %s0 = inlined_call_operand.vmem [shape: f32[32,256], index: 0, kind: input, shape index: {}]
  %s1 = inlined_call_operand.vmem [shape: bf16[48,32], index: 1, kind: input, shape index: {}]
  %s2 = inlined_call_operand.vmem [shape: f32[48,1], index: 2, kind: input, shape index: {}]
  %s3 = inlined_call_operand.vmem [shape: bf16[32,48], index: 3, kind: input, shape index: {}]
  %s4 = inlined_call_operand.vmem [shape: f32[16,1], index: 4, kind: input, shape index: {}]
  %s5 = inlined_call_operand.vmem [shape: bf16[16,16], index: 5, kind: input, shape index: {}]
  %s6 = inlined_call_operand.vmem [shape: f32[16,1], index: 6, kind: input, shape index: {}]
  %s7 = inlined_call_operand.vmem [shape: bf16[4,16], index: 7, kind: input, shape index: {}]
  %s8 = inlined_call_operand.vmem [shape: f32[4,1], index: 8, kind: input, shape index: {}]
  %s9 = inlined_call_operand.hbm [shape: f32[4,256], index: 9, kind: output, shape index: {}]
  %s10 = sld [smem:[#allocation0]]
  $region107: #{tpu_custom_call.1} parent=0
    _
  %s12 = ssub.s32 1, %s10
  %s13 = scalar_select 0, %s12, %s10
  $region1: #{tpu_custom_call.1} parent=0
    #allocation2 [shape = 'u8[32768]{0}', space=vmem, size = 0x8000, scoped, tag = 'input window, operand 0']
    #allocation3 [shape = 'u8[4096]{0}', space=vmem, size = 0x1000, scoped, tag = 'output window, operand 0']
    #allocation4 [shape = 's32[2]{0}', space=sflag, size = 0x8, scoped, tag = 'scoped memory for tpu_custom_call.1']
    %14 = vsyncpa [#allocation4], 0
    %s15 = scalar_lea.sflag [#allocation4], 1
    %16 = vsyncpa %s15, 0
    loop: start=0, step=1, limit=4
    $region2: #{tpu_custom_call.1} parent=1 // loop_pre_header
      _
    $region3: #{tpu_custom_call.1} parent=1 // loop_header
      %s18 = sphi 0, %s22
      %p19 = scmp.ge.s32.totalorder %s18, 4
      %s28 = sphi 0, %s30
      %s31 = sphi 0, %s28
      %s32 = sphi 0, %s31
      %s48 = sphi 0, %s32
      %s52 = sphi 0, %s52
      %s54 = sphi 0, %s52
      %s55 = sphi 0, %s54
      %s69 = sphi 0, %s55
      %s73 = sphi 0, %s73
      %s75 = sphi 0, %s73
      %s76 = sphi 0, %s75
      %s90 = sphi 0, %s76
      %s94 = sphi 0, %s94
      %s96 = sphi 0, %s94
      %s97 = sphi 0, %s96
      %s111 = sphi 0, %s97
      %s115 = sphi 0, %s115
      %s117 = sphi 0, %s115
      %s118 = sphi 0, %s117
      %s132 = sphi 0, %s118
      %s136 = sphi 0, %s136
      %s138 = sphi 0, %s136
      %s139 = sphi 0, %s138
      %s153 = sphi 0, %s139
      %s157 = sphi 0, %s157
      %s159 = sphi 0, %s157
      %s160 = sphi 0, %s159
      %s174 = sphi 0, %s160
      %s178 = sphi 0, %s178
      %s180 = sphi 0, %s178
      %s181 = sphi 0, %s180
      %s195 = sphi 0, %s181
      %s199 = sphi 0, %s199
      %s201 = sphi 0, %s199
      %s202 = sphi 0, %s201
      %s216 = sphi 0, %s202
      %s222 = sphi 0, %s224
      %s225 = sphi 0, %s222
      %s226 = sphi 0, %s225
      %s242 = sphi 0, %s226
    $region4: #{tpu_custom_call.1} parent=1 // loop_header_branch
      %21 = sbr.rel (%p19) target = $region8
    $region5: #{tpu_custom_call.1} parent=1 // loop_body
      %s23 = ssub.s32 %s18, 1
      %s24 = ssub.s32 %s18, 2
      %s25 = sadd.s32 %s18, 1
      %s26 = ssub.s32 %s18, %s25
      %p27 = scmp.eq.s32.totalorder %s26, 0
      %s29 = sadd.s32 %s28, 1
      %s30 = scalar_select %p27, %s28, %s29
      %p33 = pneg %p27
      %p34 = scmp.eq.s32.totalorder %s18, 1
      %p35 = por %p33, %p34
      %p36 = scmp.ne.s32.totalorder %s28, %s31
      %p37 = scmp.eq.s32.totalorder %s18, 0
      %p38 = por %p36, %p37
      %p39 = scmp.ne.s32.totalorder %s28, %s31
      %p40 = scmp.eq.s32.totalorder %s23, 1
      %p41 = por %p39, %p40
      %p42 = scmp.ne.s32.totalorder %s31, %s32
      %p43 = scmp.eq.s32.totalorder %s23, 0
      %p44 = por %p42, %p43
      %p45 = scmp.ne.s32.totalorder %s31, %s32
      %p46 = scmp.eq.s32.totalorder %s24, 1
      %p47 = por %p45, %p46
      %p49 = scmp.ne.s32.totalorder %s32, %s48
      %p50 = scmp.eq.s32.totalorder %s24, 0
      %p51 = por %p49, %p50
      %s53 = sadd.s32 %s52, 1
      %p56 = scmp.eq.s32.totalorder %s18, 1
      %p57 = scmp.ne.s32.totalorder %s52, %s54
      %p58 = scmp.eq.s32.totalorder %s18, 0
      %p59 = por %p57, %p58
      %p60 = scmp.ne.s32.totalorder %s52, %s54
      %p61 = scmp.eq.s32.totalorder %s23, 1
      %p62 = por %p60, %p61
      %p63 = scmp.ne.s32.totalorder %s54, %s55
      %p64 = scmp.eq.s32.totalorder %s23, 0
      %p65 = por %p63, %p64
      %p66 = scmp.ne.s32.totalorder %s54, %s55
      %p67 = scmp.eq.s32.totalorder %s24, 1
      %p68 = por %p66, %p67
      %p70 = scmp.ne.s32.totalorder %s55, %s69
      %p71 = scmp.eq.s32.totalorder %s24, 0
      %p72 = por %p70, %p71
      %s74 = sadd.s32 %s73, 1
      %p77 = scmp.eq.s32.totalorder %s18, 1
      %p78 = scmp.ne.s32.totalorder %s73, %s75
      %p79 = scmp.eq.s32.totalorder %s18, 0
      %p80 = por %p78, %p79
      %p81 = scmp.ne.s32.totalorder %s73, %s75
      %p82 = scmp.eq.s32.totalorder %s23, 1
      %p83 = por %p81, %p82
      %p84 = scmp.ne.s32.totalorder %s75, %s76
      %p85 = scmp.eq.s32.totalorder %s23, 0
      %p86 = por %p84, %p85
      %p87 = scmp.ne.s32.totalorder %s75, %s76
      %p88 = scmp.eq.s32.totalorder %s24, 1
      %p89 = por %p87, %p88
      %p91 = scmp.ne.s32.totalorder %s76, %s90
      %p92 = scmp.eq.s32.totalorder %s24, 0
      %p93 = por %p91, %p92
      %s95 = sadd.s32 %s94, 1
      %p98 = scmp.eq.s32.totalorder %s18, 1
      %p99 = scmp.ne.s32.totalorder %s94, %s96
      %p100 = scmp.eq.s32.totalorder %s18, 0
      %p101 = por %p99, %p100
      %p102 = scmp.ne.s32.totalorder %s94, %s96
      %p103 = scmp.eq.s32.totalorder %s23, 1
      %p104 = por %p102, %p103
      %p105 = scmp.ne.s32.totalorder %s96, %s97
      %p106 = scmp.eq.s32.totalorder %s23, 0
      %p107 = por %p105, %p106
      %p108 = scmp.ne.s32.totalorder %s96, %s97
      %p109 = scmp.eq.s32.totalorder %s24, 1
      %p110 = por %p108, %p109
      %p112 = scmp.ne.s32.totalorder %s97, %s111
      %p113 = scmp.eq.s32.totalorder %s24, 0
      %p114 = por %p112, %p113
      %s116 = sadd.s32 %s115, 1
      %p119 = scmp.eq.s32.totalorder %s18, 1
      %p120 = scmp.ne.s32.totalorder %s115, %s117
      %p121 = scmp.eq.s32.totalorder %s18, 0
      %p122 = por %p120, %p121
      %p123 = scmp.ne.s32.totalorder %s115, %s117
      %p124 = scmp.eq.s32.totalorder %s23, 1
      %p125 = por %p123, %p124
      %p126 = scmp.ne.s32.totalorder %s117, %s118
      %p127 = scmp.eq.s32.totalorder %s23, 0
      %p128 = por %p126, %p127
      %p129 = scmp.ne.s32.totalorder %s117, %s118
      %p130 = scmp.eq.s32.totalorder %s24, 1
      %p131 = por %p129, %p130
      %p133 = scmp.ne.s32.totalorder %s118, %s132
      %p134 = scmp.eq.s32.totalorder %s24, 0
      %p135 = por %p133, %p134
      %s137 = sadd.s32 %s136, 1
      %p140 = scmp.eq.s32.totalorder %s18, 1
      %p141 = scmp.ne.s32.totalorder %s136, %s138
      %p142 = scmp.eq.s32.totalorder %s18, 0
      %p143 = por %p141, %p142
      %p144 = scmp.ne.s32.totalorder %s136, %s138
      %p145 = scmp.eq.s32.totalorder %s23, 1
      %p146 = por %p144, %p145
      %p147 = scmp.ne.s32.totalorder %s138, %s139
      %p148 = scmp.eq.s32.totalorder %s23, 0
      %p149 = por %p147, %p148
      %p150 = scmp.ne.s32.totalorder %s138, %s139
      %p151 = scmp.eq.s32.totalorder %s24, 1
      %p152 = por %p150, %p151
      %p154 = scmp.ne.s32.totalorder %s139, %s153
      %p155 = scmp.eq.s32.totalorder %s24, 0
      %p156 = por %p154, %p155
      %s158 = sadd.s32 %s157, 1
      %p161 = scmp.eq.s32.totalorder %s18, 1
      %p162 = scmp.ne.s32.totalorder %s157, %s159
      %p163 = scmp.eq.s32.totalorder %s18, 0
      %p164 = por %p162, %p163
      %p165 = scmp.ne.s32.totalorder %s157, %s159
      %p166 = scmp.eq.s32.totalorder %s23, 1
      %p167 = por %p165, %p166
      %p168 = scmp.ne.s32.totalorder %s159, %s160
      %p169 = scmp.eq.s32.totalorder %s23, 0
      %p170 = por %p168, %p169
      %p171 = scmp.ne.s32.totalorder %s159, %s160
      %p172 = scmp.eq.s32.totalorder %s24, 1
      %p173 = por %p171, %p172
      %p175 = scmp.ne.s32.totalorder %s160, %s174
      %p176 = scmp.eq.s32.totalorder %s24, 0
      %p177 = por %p175, %p176
      %s179 = sadd.s32 %s178, 1
      %p182 = scmp.eq.s32.totalorder %s18, 1
      %p183 = scmp.ne.s32.totalorder %s178, %s180
      %p184 = scmp.eq.s32.totalorder %s18, 0
      %p185 = por %p183, %p184
      %p186 = scmp.ne.s32.totalorder %s178, %s180
      %p187 = scmp.eq.s32.totalorder %s23, 1
      %p188 = por %p186, %p187
      %p189 = scmp.ne.s32.totalorder %s180, %s181
      %p190 = scmp.eq.s32.totalorder %s23, 0
      %p191 = por %p189, %p190
      %p192 = scmp.ne.s32.totalorder %s180, %s181
      %p193 = scmp.eq.s32.totalorder %s24, 1
      %p194 = por %p192, %p193
      %p196 = scmp.ne.s32.totalorder %s181, %s195
      %p197 = scmp.eq.s32.totalorder %s24, 0
      %p198 = por %p196, %p197
      %s200 = sadd.s32 %s199, 1
      %p203 = scmp.eq.s32.totalorder %s18, 1
      %p204 = scmp.ne.s32.totalorder %s199, %s201
      %p205 = scmp.eq.s32.totalorder %s18, 0
      %p206 = por %p204, %p205
      %p207 = scmp.ne.s32.totalorder %s199, %s201
      %p208 = scmp.eq.s32.totalorder %s23, 1
      %p209 = por %p207, %p208
      %p210 = scmp.ne.s32.totalorder %s201, %s202
      %p211 = scmp.eq.s32.totalorder %s23, 0
      %p212 = por %p210, %p211
      %p213 = scmp.ne.s32.totalorder %s201, %s202
      %p214 = scmp.eq.s32.totalorder %s24, 1
      %p215 = por %p213, %p214
      %p217 = scmp.ne.s32.totalorder %s202, %s216
      %p218 = scmp.eq.s32.totalorder %s24, 0
      %p219 = por %p217, %p218
      %s220 = ssub.s32 %s18, %s25
      %p221 = scmp.eq.s32.totalorder %s220, 0
      %s223 = sadd.s32 %s222, 1
      %s224 = scalar_select %p221, %s222, %s223
      %p227 = pneg %p221
      %p228 = scmp.eq.s32.totalorder %s18, 1
      %p229 = por %p227, %p228
      %p230 = scmp.ne.s32.totalorder %s222, %s225
      %p231 = scmp.eq.s32.totalorder %s18, 0
      %p232 = por %p230, %p231
      %p233 = scmp.ne.s32.totalorder %s222, %s225
      %p234 = scmp.eq.s32.totalorder %s23, 1
      %p235 = por %p233, %p234
      %p236 = scmp.ne.s32.totalorder %s225, %s226
      %p237 = scmp.eq.s32.totalorder %s23, 0
      %p238 = por %p236, %p237
      %p239 = scmp.ne.s32.totalorder %s225, %s226
      %p240 = scmp.eq.s32.totalorder %s24, 1
      %p241 = por %p239, %p240
      %p243 = scmp.ne.s32.totalorder %s226, %s242
      %p244 = scmp.eq.s32.totalorder %s24, 0
      %p245 = por %p243, %p244
      %p246 = scmp.le.s32.totalorder 1, %s18
      %p247 = scmp.lt.s32.totalorder %s18, 3
      %p248 = pnand %p246, %p247
      %p249 = pneg %p248
      // Predicated region
      $region9: #{tpu_custom_call.1} parent=5 // pred_check
        _
      $region10: #{tpu_custom_call.1} parent=5 // pred_check_branch
        %251 = sbr.rel (%p248) target = $region12
      $region11: #{tpu_custom_call.1} parent=5 // pred_region
        %s252 = ssub.s32 %s18, 1
        // Predicated region
        $region13: #{tpu_custom_call.1} parent=11 // pred_check
          %p253 = pneg %p65
        $region14: #{tpu_custom_call.1} parent=11 // pred_check_branch
          %255 = sbr.rel (%p253) target = $region16
        $region15: #{tpu_custom_call.1} parent=11 // pred_region
          _
        $region16: #{tpu_custom_call.1} parent=11 // pred_fallthru
          _
        // Predicated region
        $region17: #{tpu_custom_call.1} parent=11 // pred_check
          %p256 = pneg %p86
        $region18: #{tpu_custom_call.1} parent=11 // pred_check_branch
          %258 = sbr.rel (%p256) target = $region20
        $region19: #{tpu_custom_call.1} parent=11 // pred_region
          _
        $region20: #{tpu_custom_call.1} parent=11 // pred_fallthru
          _
        // Predicated region
        $region21: #{tpu_custom_call.1} parent=11 // pred_check
          %p259 = pneg %p107
        $region22: #{tpu_custom_call.1} parent=11 // pred_check_branch
          %261 = sbr.rel (%p259) target = $region24
        $region23: #{tpu_custom_call.1} parent=11 // pred_region
          _
        $region24: #{tpu_custom_call.1} parent=11 // pred_fallthru
          _
        // Predicated region
        $region25: #{tpu_custom_call.1} parent=11 // pred_check
          %p262 = pneg %p128
        $region26: #{tpu_custom_call.1} parent=11 // pred_check_branch
          %264 = sbr.rel (%p262) target = $region28
        $region27: #{tpu_custom_call.1} parent=11 // pred_region
          _
        $region28: #{tpu_custom_call.1} parent=11 // pred_fallthru
          _
        // Predicated region
        $region29: #{tpu_custom_call.1} parent=11 // pred_check
          %p265 = pneg %p149
        $region30: #{tpu_custom_call.1} parent=11 // pred_check_branch
          %267 = sbr.rel (%p265) target = $region32
        $region31: #{tpu_custom_call.1} parent=11 // pred_region
          _
        $region32: #{tpu_custom_call.1} parent=11 // pred_fallthru
          _
        // Predicated region
        $region33: #{tpu_custom_call.1} parent=11 // pred_check
          %p268 = pneg %p170
        $region34: #{tpu_custom_call.1} parent=11 // pred_check_branch
          %270 = sbr.rel (%p268) target = $region36
        $region35: #{tpu_custom_call.1} parent=11 // pred_region
          _
        $region36: #{tpu_custom_call.1} parent=11 // pred_fallthru
          _
        // Predicated region
        $region37: #{tpu_custom_call.1} parent=11 // pred_check
          %p271 = pneg %p191
        $region38: #{tpu_custom_call.1} parent=11 // pred_check_branch
          %273 = sbr.rel (%p271) target = $region40
        $region39: #{tpu_custom_call.1} parent=11 // pred_region
          _
        $region40: #{tpu_custom_call.1} parent=11 // pred_fallthru
          _
        // Predicated region
        $region41: #{tpu_custom_call.1} parent=11 // pred_check
          %p274 = pneg %p212
        $region42: #{tpu_custom_call.1} parent=11 // pred_check_branch
          %276 = sbr.rel (%p274) target = $region44
        $region43: #{tpu_custom_call.1} parent=11 // pred_region
          _
        $region44: #{tpu_custom_call.1} parent=11 // pred_fallthru
          _
      $region12: #{tpu_custom_call.1} parent=5 // pred_fallthru
        _
      %p277 = scmp.lt.s32.totalorder %s18, 2
      // Predicated region
      $region45: #{tpu_custom_call.1} parent=5 // pred_check
        %p278 = pneg %p277
      $region46: #{tpu_custom_call.1} parent=5 // pred_check_branch
        %280 = sbr.rel (%p278) target = $region48
      $region47: #{tpu_custom_call.1} parent=5 // pred_region
        // Predicated region
        $region49: #{tpu_custom_call.1} parent=47 // pred_check
          %p281 = pneg %p38
        $region50: #{tpu_custom_call.1} parent=47 // pred_check_branch
          %283 = sbr.rel (%p281) target = $region52
        $region51: #{tpu_custom_call.1} parent=47 // pred_region
          %s284 = sand.u32 %s28, 1
          %s285 = sand.u32 %s28, 1
          %s286 = smul.addr %s285, 32
          %s287 = scalar_lea.vmem [#allocation2], %s286
          %s288 = smul.addr %s18, 8
          %s289 = scalar_lea.vmem %s0, %s288
          // Predicated region
          $region53: #{tpu_custom_call.1} parent=51 // pred_check
            _
          $region54: #{tpu_custom_call.1} parent=51 // pred_check_branch
            %291 = sbr.rel (0) target = $region56
          $region55: #{tpu_custom_call.1} parent=51 // pred_region
            // Predicated region
            $region57: #{tpu_custom_call.1} parent=55 // pred_check
              _
            $region58: #{tpu_custom_call.1} parent=55 // pred_check_branch
              %293 = sbr.rel (0) target = $region60
            $region59: #{tpu_custom_call.1} parent=55 // pred_region
              // Predicated region
              $region72: #{tpu_custom_call.1} parent=59 // pred_check
                _
              $region73: #{tpu_custom_call.1} parent=59 // pred_check_branch
                %314 = sbr.rel (0) target = $region75
              $region74: #{tpu_custom_call.1} parent=59 // pred_region
                loop: start=0, step=1, limit=1
                $region76: #{tpu_custom_call.1} parent=74 // loop_pre_header
                  _
                $region77: #{tpu_custom_call.1} parent=74 // loop_header
                  %s316 = sphi 0, %s320
                  %p317 = scmp.ge.s32.totalorder %s316, 1
                  %s321 = sphi %s289, %s289
                  %s322 = sphi %s287, %s287
                $region78: #{tpu_custom_call.1} parent=74 // loop_header_branch
                  %319 = sbr.rel (%p317) target = $region82
                $region79: #{tpu_custom_call.1} parent=74 // loop_body
                  %v323 = vld [vmem:[%s321] sm:$0xff]
                  %324 = vst [vmem:[%s322] sm:$0xff] %v323
                  %v325 = vld [vmem:[%s321 + $0x10] sm:$0xff]
                  %326 = vst [vmem:[%s322 + $0x8] sm:$0xff] %v325
                  %v327 = vld [vmem:[%s321 + $0x20] sm:$0xff]
                  %328 = vst [vmem:[%s322 + $0x10] sm:$0xff] %v327
                  %v329 = vld [vmem:[%s321 + $0x30] sm:$0xff]
                  %330 = vst [vmem:[%s322 + $0x18] sm:$0xff] %v329
                $region80: #{tpu_custom_call.1} parent=74 // loop_footer
                  %s320 = sadd.s32 1, %s316
                $region81: #{tpu_custom_call.1} parent=74 // loop_footer_branch
                  %315 = sbr.rel target = $region77
                $region82: #{tpu_custom_call.1} parent=74 // loop_exit
                  _
              $region75: #{tpu_custom_call.1} parent=59 // pred_fallthru
                _
              // Predicated region
              $region83: #{tpu_custom_call.1} parent=59 // pred_check
                _
              $region84: #{tpu_custom_call.1} parent=59 // pred_check_branch
                %332 = sbr.rel target = $region86
              $region85: #{tpu_custom_call.1} parent=59 // pred_region
                _
              $region86: #{tpu_custom_call.1} parent=59 // pred_fallthru
                _
            $region60: #{tpu_custom_call.1} parent=55 // pred_fallthru
              _
            // Predicated region
            $region61: #{tpu_custom_call.1} parent=55 // pred_check
              _
            $region62: #{tpu_custom_call.1} parent=55 // pred_check_branch
              %295 = sbr.rel target = $region64
            $region63: #{tpu_custom_call.1} parent=55 // pred_region
              loop: start=0, step=1, limit=1
              $region65: #{tpu_custom_call.1} parent=63 // loop_pre_header
                _
              $region66: #{tpu_custom_call.1} parent=63 // loop_header
                %s298 = sphi 0, %s302
                %p299 = scmp.ge.s32.totalorder %s298, 1
                %s303 = sphi %s289, %s289
                %s304 = sphi %s287, %s287
              $region67: #{tpu_custom_call.1} parent=63 // loop_header_branch
                %301 = sbr.rel (%p299) target = $region71
              $region68: #{tpu_custom_call.1} parent=63 // loop_body
                %v305 = vld [vmem:[%s303] sm:$0xff]
                %306 = vst [vmem:[%s304] sm:$0xff] %v305
                %v307 = vld [vmem:[%s303 + $0x10] sm:$0xff]
                %308 = vst [vmem:[%s304 + $0x8] sm:$0xff] %v307
                %v309 = vld [vmem:[%s303 + $0x20] sm:$0xff]
                %310 = vst [vmem:[%s304 + $0x10] sm:$0xff] %v309
                %v311 = vld [vmem:[%s303 + $0x30] sm:$0xff]
                %312 = vst [vmem:[%s304 + $0x18] sm:$0xff] %v311
              $region69: #{tpu_custom_call.1} parent=63 // loop_footer
                %s302 = sadd.s32 1, %s298
              $region70: #{tpu_custom_call.1} parent=63 // loop_footer_branch
                %297 = sbr.rel target = $region66
              $region71: #{tpu_custom_call.1} parent=63 // loop_exit
                _
            $region64: #{tpu_custom_call.1} parent=55 // pred_fallthru
              _
          $region56: #{tpu_custom_call.1} parent=51 // pred_fallthru
            _
          %333 = vnop
        $region52: #{tpu_custom_call.1} parent=47 // pred_fallthru
          _
      $region48: #{tpu_custom_call.1} parent=5 // pred_fallthru
        _
      %p334 = scmp.le.s32.totalorder 1, %s18
      %p335 = scmp.lt.s32.totalorder %s18, 3
      %p336 = pnand %p334, %p335
      %p337 = pneg %p336
      // Predicated region
      $region87: #{tpu_custom_call.1} parent=5 // pred_check
        _
      $region88: #{tpu_custom_call.1} parent=5 // pred_check_branch
        %339 = sbr.rel (%p336) target = $region90
      $region89: #{tpu_custom_call.1} parent=5 // pred_region
        %s340 = ssub.s32 %s18, 1
        %s341 = sand.u32 %s31, 1
        %s342 = sand.u32 %s31, 1
        %s343 = smul.addr %s342, 32
        %s344 = scalar_lea.vmem [#allocation2], %s343
        // Predicated region
        $region91: #{tpu_custom_call.1} parent=89 // pred_check
          %p345 = pneg %p44
        $region92: #{tpu_custom_call.1} parent=89 // pred_check_branch
          %347 = sbr.rel (%p345) target = $region94
        $region93: #{tpu_custom_call.1} parent=89 // pred_region
          _
        $region94: #{tpu_custom_call.1} parent=89 // pred_fallthru
          _
        %s348 = sand.u32 %s31, 1
        %s349 = sand.u32 %s31, 1
        %s350 = smul.addr %s349, 32
        %s351 = scalar_lea.vmem [#allocation2], %s350
        %p352 = pneg %p44
        %p353 = pneg %p41
        %p354 = pneg %p65
        %p355 = pneg %p62
        %p356 = pneg %p86
        %p357 = pneg %p83
        %p358 = pneg %p107
        %p359 = pneg %p104
        %p360 = pneg %p128
        %p361 = pneg %p125
        %p362 = pneg %p149
        %p363 = pneg %p146
        %p364 = pneg %p170
        %p365 = pneg %p167
        %p366 = pneg %p191
        %p367 = pneg %p188
        %p368 = pneg %p212
        %p369 = pneg %p209
        %p370 = pneg %p238
        %p371 = pneg %p235
        %s372 = sand.u32 %s225, 1
        %s373 = scalar_lea.sflag [#allocation4], %s372
        %s374 = sand.u32 %s225, 1
        %s375 = smul.addr %s374, 4
        %s376 = scalar_lea.vmem [#allocation3], %s375
        %v378 = vld [vmem:[%s344] sm:$0xff]
        %v379 = vld [vmem:[%s344 + $0x8] sm:$0xff]
        %v380 = vld [vmem:[%s344 + $0x10] sm:$0xff]
        %v381 = vld [vmem:[%s344 + $0x18] sm:$0xff]
        %v382 = vpack.c.bf16 %v379, %v378
        %v383 = vpack.c.bf16 %v381, %v380
        %v384 = vld [vmem:[%s1] sm:$0xf]
        %v385 = vld [vmem:[%s1 + $0x4] sm:$0xf]
        %v386 = vld [vmem:[%s1 + $0x8] sm:$0xf]
        %v387 = vld [vmem:[%s1 + $0xc] sm:$0xf]
        %v388 = vld [vmem:[%s1 + $0x10] sm:$0xf]
        %v389 = vld [vmem:[%s1 + $0x14] sm:$0xf]
        %v390 = vld [vmem:[%s2] sm:$0xff]
        %v391 = vld [vmem:[%s2 + $0x8] sm:$0xff]
        %v392 = vld [vmem:[%s2 + $0x10] sm:$0xff]
        %v393 = vld [vmem:[%s2 + $0x18] sm:$0xff]
        %v394 = vld [vmem:[%s2 + $0x20] sm:$0xff]
        %v395 = vld [vmem:[%s2 + $0x28] sm:$0xff]
        %397 = vset.pattern.permute.xlu0 0
        %398 = vperm.xlu0 %397, %v390
        %v399 = vpop.permute.xlu0 %398
        %402 = vset.pattern.permute.xlu0 0
        %403 = vperm.xlu0 %402, %v391
        %v404 = vpop.permute.xlu0 %403
        %407 = vset.pattern.permute.xlu0 0
        %408 = vperm.xlu0 %407, %v392
        %v409 = vpop.permute.xlu0 %408
        %412 = vset.pattern.permute.xlu0 0
        %413 = vperm.xlu0 %412, %v393
        %v414 = vpop.permute.xlu0 %413
        %417 = vset.pattern.permute.xlu0 0
        %418 = vperm.xlu0 %417, %v394
        %v419 = vpop.permute.xlu0 %418
        %422 = vset.pattern.permute.xlu0 0
        %423 = vperm.xlu0 %422, %v395
        %v424 = vpop.permute.xlu0 %423
        %v432 = vunpack.c.l.b16 %v384
        %v433 = vunpack.c.l.b16 %v385
        %v434 = vunpack.c.l.b16 %v386
        %v435 = vunpack.c.l.b16 %v387
        %v436 = vunpack.c.l.b16 %v388
        %v437 = vunpack.c.l.b16 %v389
        %v438 = vpack.c.b16 %v433, %v432
        %v439 = vpack.c.b16 %v435, %v434
        %v440 = vpack.c.b16 %v437, %v436
        %vm441 = vcmask 261120
        %v443 = vsel %vm441, %v438, 0
        %v446 = vsel %vm441, %v439, 0
        %v449 = vsel %vm441, %v440, 0
        %451 = vmatprep.subr.bf16.mxu0 0
        %452 = vmatpush1.bf16.msra.mxu0 %v382
        %453 = vmatprep.subr.bf16.mxu0 0
        %454 = vmatpush1.bf16.msra.mxu0 %v383
        %455 = vmatprep.subr.bf16.mxu0 0
        %456 = vmatpush1.bf16.msra.mxu0 0
        %457 = vmatprep.subr.bf16.mxu0 0
        %458 = vmatpush1.bf16.msra.mxu0 0
        %459 = vmatprep.subr.bf16.mxu0 0
        %460 = vmatpush1.bf16.msra.mxu0 0
        %461 = vmatprep.subr.bf16.mxu0 0
        %462 = vmatpush1.bf16.msra.mxu0 0
        %463 = vmatprep.subr.bf16.mxu0 0
        %464 = vmatpush1.bf16.msra.mxu0 0
        %465 = vmatprep.subr.bf16.mxu0 0
        %466 = vmatpush1.bf16.msra.mxu0 0
        %467 = vmatprep.subr.bf16.mxu0 0
        %468 = vmatpush1.bf16.msra.mxu0 0
        %469 = vmatprep.subr.bf16.mxu0 0
        %470 = vmatpush1.bf16.msra.mxu0 0
        %471 = vmatprep.subr.bf16.mxu0 0
        %472 = vmatpush1.bf16.msra.mxu0 0
        %473 = vmatprep.subr.bf16.mxu0 0
        %474 = vmatpush1.bf16.msra.mxu0 0
        %475 = vmatprep.subr.bf16.mxu0 0
        %476 = vmatpush1.bf16.msra.mxu0 0
        %477 = vmatprep.subr.bf16.mxu0 0
        %478 = vmatpush1.bf16.msra.mxu0 0
        %479 = vmatprep.subr.bf16.mxu0 0
        %480 = vmatpush1.bf16.msra.mxu0 0
        %481 = vmatprep.subr.bf16.mxu0 0
        %482 = vmatpush1.bf16.msra.mxu0 0
        %483 = vmatprep.mubr.bf16.mxu0 0
        %484 = vmatmul.mubr.bf16.gmra.mrb[0].mxu0 %v443
        %v485 = vpop.f32.mrb[0].mxu0
        %v486 = vadd.f32 %v399, %v485
        %v487 = vpop.f32.mrb[0].mxu0
        %v488 = vpop.f32.mrb[0].mxu0
        %v489 = vadd.f32 %v404, %v488
        %v490 = vpop.f32.mrb[0].mxu0
        %491 = vmatprep.mubr.bf16.mxu0 0
        %492 = vmatmul.mubr.bf16.gmra.mrb[0].mxu0 %v446
        %v493 = vpop.f32.mrb[0].mxu0
        %v494 = vadd.f32 %v409, %v493
        %v495 = vpop.f32.mrb[0].mxu0
        %v496 = vpop.f32.mrb[0].mxu0
        %v497 = vadd.f32 %v414, %v496
        %v498 = vpop.f32.mrb[0].mxu0
        %499 = vmatprep.mubr.bf16.mxu0 0
        %500 = vmatmul.mubr.bf16.gmra.mrb[0].mxu0 %v449
        %v501 = vpop.f32.mrb[0].mxu0
        %v502 = vadd.f32 %v419, %v501
        %v503 = vpop.f32.mrb[0].mxu0
        %v504 = vpop.f32.mrb[0].mxu0
        %v505 = vadd.f32 %v424, %v504
        %v506 = vpop.f32.mrb[0].mxu0
        %507 = vdwg.mxu0
        %v508 = vmul.f32 %v486, 0.01
        %v509 = vmul.f32 %v489, 0.01
        %v510 = vmul.f32 %v494, 0.01
        %v511 = vmul.f32 %v497, 0.01
        %v512 = vmul.f32 %v502, 0.01
        %v513 = vmul.f32 %v505, 0.01
        %v514 = vmax.f32 %v486, %v508
        %v515 = vmax.f32 %v489, %v509
        %v516 = vmax.f32 %v494, %v510
        %v517 = vmax.f32 %v497, %v511
        %v518 = vmax.f32 %v502, %v512
        %v519 = vmax.f32 %v505, %v513
        %v520 = vpack.c.bf16 %v515, %v514
        %v521 = vpack.c.bf16 %v517, %v516
        %v522 = vpack.c.bf16 %v519, %v518
        %v523 = vld [vmem:[%s3] sm:$0xf]
        %v524 = vld [vmem:[%s3 + $0x4] sm:$0xf]
        %v525 = vld [vmem:[%s3 + $0x8] sm:$0xf]
        %v526 = vld [vmem:[%s3 + $0xc] sm:$0xf]
        %v531 = vunpack.c.l.b16 %v523
        %v532 = vunpack.c.l.b16 %v524
        %v533 = vunpack.c.l.b16 %v525
        %v534 = vunpack.c.l.b16 %v526
        %v535 = vpack.c.b16 %v532, %v531
        %v536 = vpack.c.b16 %v534, %v533
        %vm537 = vcmask 392192
        %v539 = vsel %vm537, %v535, 0
        %v542 = vsel %vm537, %v536, 0
        %544 = vmatprep.subr.bf16.mxu0 0
        %545 = vmatpush1.bf16.msra.mxu0 %v520
        %546 = vmatprep.subr.bf16.mxu0 0
        %547 = vmatpush1.bf16.msra.mxu0 %v521
        %548 = vmatprep.subr.bf16.mxu0 0
        %549 = vmatpush1.bf16.msra.mxu0 %v522
        %550 = vmatprep.subr.bf16.mxu0 0
        %551 = vmatpush1.bf16.msra.mxu0 0
        %552 = vmatprep.subr.bf16.mxu0 0
        %553 = vmatpush1.bf16.msra.mxu0 0
        %554 = vmatprep.subr.bf16.mxu0 0
        %555 = vmatpush1.bf16.msra.mxu0 0
        %556 = vmatprep.subr.bf16.mxu0 0
        %557 = vmatpush1.bf16.msra.mxu0 0
        %558 = vmatprep.subr.bf16.mxu0 0
        %559 = vmatpush1.bf16.msra.mxu0 0
        %560 = vmatprep.subr.bf16.mxu0 0
        %561 = vmatpush1.bf16.msra.mxu0 0
        %562 = vmatprep.subr.bf16.mxu0 0
        %563 = vmatpush1.bf16.msra.mxu0 0
        %564 = vmatprep.subr.bf16.mxu0 0
        %565 = vmatpush1.bf16.msra.mxu0 0
        %566 = vmatprep.subr.bf16.mxu0 0
        %567 = vmatpush1.bf16.msra.mxu0 0
        %568 = vmatprep.subr.bf16.mxu0 0
        %569 = vmatpush1.bf16.msra.mxu0 0
        %570 = vmatprep.subr.bf16.mxu0 0
        %571 = vmatpush1.bf16.msra.mxu0 0
        %572 = vmatprep.subr.bf16.mxu0 0
        %573 = vmatpush1.bf16.msra.mxu0 0
        %574 = vmatprep.subr.bf16.mxu0 0
        %575 = vmatpush1.bf16.msra.mxu0 0
        %576 = vmatprep.mubr.bf16.mxu0 0
        %577 = vmatmul.mubr.bf16.gmra.mrb[0].mxu0 %v539
        %v578 = vpop.f32.mrb[0].mxu0
        %v579 = vadd.f32 0.0, %v578
        %v580 = vpop.f32.mrb[0].mxu0
        %v581 = vpop.f32.mrb[0].mxu0
        %v582 = vadd.f32 0.0, %v581
        %v583 = vpop.f32.mrb[0].mxu0
        %584 = vmatprep.mubr.bf16.mxu0 0
        %585 = vmatmul.mubr.bf16.gmra.mrb[0].mxu0 %v542
        %v586 = vpop.f32.mrb[0].mxu0
        %v587 = vadd.f32 0.0, %v586
        %v588 = vpop.f32.mrb[0].mxu0
        %v589 = vpop.f32.mrb[0].mxu0
        %v590 = vadd.f32 0.0, %v589
        %v591 = vpop.f32.mrb[0].mxu0
        %592 = vdwg.mxu0
        %v593 = vld [vmem:[%s4] sm:$0xff]
        %v594 = vld [vmem:[%s4 + $0x8] sm:$0xff]
        %596 = vset.pattern.permute.xlu0 0
        %597 = vperm.xlu0 %596, %v593
        %v598 = vpop.permute.xlu0 %597
        %601 = vset.pattern.permute.xlu0 0
        %602 = vperm.xlu0 %601, %v594
        %v603 = vpop.permute.xlu0 %602
        %v605 = vadd.f32 %v579, %v598
        %v606 = vadd.f32 %v582, %v603
        %v607 = vmul.f32 %v605, 0.01
        %v608 = vmul.f32 %v606, 0.01
        %v609 = vmax.f32 %v605, %v607
        %v610 = vmax.f32 %v606, %v608
        %v611 = vld [vmem:[%s5] sm:$0xf]
        %v612 = vld [vmem:[%s5 + $0x4] sm:$0xf]
        %v613 = vpack.c.bf16 %v610, %v609
        %v616 = vunpack.c.l.b16 %v611
        %v617 = vunpack.c.l.b16 %v612
        %v618 = vpack.c.b16 %v617, %v616
        %vm619 = vcmask 130048
        %v621 = vsel %vm619, %v618, 0
        %623 = vmatprep.subr.bf16.mxu0 0
        %624 = vmatpush1.bf16.msra.mxu0 %v613
        %625 = vmatprep.subr.bf16.mxu0 0
        %626 = vmatpush1.bf16.msra.mxu0 0
        %627 = vmatprep.subr.bf16.mxu0 0
        %628 = vmatpush1.bf16.msra.mxu0 0
        %629 = vmatprep.subr.bf16.mxu0 0
        %630 = vmatpush1.bf16.msra.mxu0 0
        %631 = vmatprep.subr.bf16.mxu0 0
        %632 = vmatpush1.bf16.msra.mxu0 0
        %633 = vmatprep.subr.bf16.mxu0 0
        %634 = vmatpush1.bf16.msra.mxu0 0
        %635 = vmatprep.subr.bf16.mxu0 0
        %636 = vmatpush1.bf16.msra.mxu0 0
        %637 = vmatprep.subr.bf16.mxu0 0
        %638 = vmatpush1.bf16.msra.mxu0 0
        %639 = vmatprep.subr.bf16.mxu0 0
        %640 = vmatpush1.bf16.msra.mxu0 0
        %641 = vmatprep.subr.bf16.mxu0 0
        %642 = vmatpush1.bf16.msra.mxu0 0
        %643 = vmatprep.subr.bf16.mxu0 0
        %644 = vmatpush1.bf16.msra.mxu0 0
        %645 = vmatprep.subr.bf16.mxu0 0
        %646 = vmatpush1.bf16.msra.mxu0 0
        %647 = vmatprep.subr.bf16.mxu0 0
        %648 = vmatpush1.bf16.msra.mxu0 0
        %649 = vmatprep.subr.bf16.mxu0 0
        %650 = vmatpush1.bf16.msra.mxu0 0
        %651 = vmatprep.subr.bf16.mxu0 0
        %652 = vmatpush1.bf16.msra.mxu0 0
        %653 = vmatprep.subr.bf16.mxu0 0
        %654 = vmatpush1.bf16.msra.mxu0 0
        %655 = vmatprep.mubr.bf16.mxu0 0
        %656 = vmatmul.mubr.bf16.gmra.mrb[0].mxu0 %v621
        %v657 = vpop.f32.mrb[0].mxu0
        %v658 = vadd.f32 0.0, %v657
        %v659 = vpop.f32.mrb[0].mxu0
        %v660 = vpop.f32.mrb[0].mxu0
        %v661 = vadd.f32 0.0, %v660
        %v662 = vpop.f32.mrb[0].mxu0
        %663 = vdwg.mxu0
        %v664 = vadd.f32 %v587, %v658
        %v665 = vadd.f32 %v590, %v661
        %v666 = vld [vmem:[%s6] sm:$0xff]
        %v667 = vld [vmem:[%s6 + $0x8] sm:$0xff]
        %669 = vset.pattern.permute.xlu0 0
        %670 = vperm.xlu0 %669, %v666
        %v671 = vpop.permute.xlu0 %670
        %674 = vset.pattern.permute.xlu0 0
        %675 = vperm.xlu0 %674, %v667
        %v676 = vpop.permute.xlu0 %675
        %v678 = vadd.f32 %v664, %v671
        %v679 = vadd.f32 %v665, %v676
        %v680 = vmul.f32 %v678, 0.01
        %v681 = vmul.f32 %v679, 0.01
        %v682 = vmax.f32 %v678, %v680
        %v683 = vmax.f32 %v679, %v681
        %v684 = vld [vmem:[%s7] sm:$0x3]
        %v685 = vpack.c.bf16 %v683, %v682
        %v686 = vld [vmem:[%s8] sm:$0xf]
        %688 = vset.pattern.permute.xlu0 0
        %689 = vperm.xlu0 %688, %v686
        %v690 = vpop.permute.xlu0 %689
        %v693 = vsel %vm619, %v684, 0
        %695 = vmatprep.subr.bf16.mxu0 0
        %696 = vmatpush1.bf16.msra.mxu0 %v685
        %697 = vmatprep.subr.bf16.mxu0 0
        %698 = vmatpush1.bf16.msra.mxu0 0
        %699 = vmatprep.subr.bf16.mxu0 0
        %700 = vmatpush1.bf16.msra.mxu0 0
        %701 = vmatprep.subr.bf16.mxu0 0
        %702 = vmatpush1.bf16.msra.mxu0 0
        %703 = vmatprep.subr.bf16.mxu0 0
        %704 = vmatpush1.bf16.msra.mxu0 0
        %705 = vmatprep.subr.bf16.mxu0 0
        %706 = vmatpush1.bf16.msra.mxu0 0
        %707 = vmatprep.subr.bf16.mxu0 0
        %708 = vmatpush1.bf16.msra.mxu0 0
        %709 = vmatprep.subr.bf16.mxu0 0
        %710 = vmatpush1.bf16.msra.mxu0 0
        %711 = vmatprep.subr.bf16.mxu0 0
        %712 = vmatpush1.bf16.msra.mxu0 0
        %713 = vmatprep.subr.bf16.mxu0 0
        %714 = vmatpush1.bf16.msra.mxu0 0
        %715 = vmatprep.subr.bf16.mxu0 0
        %716 = vmatpush1.bf16.msra.mxu0 0
        %717 = vmatprep.subr.bf16.mxu0 0
        %718 = vmatpush1.bf16.msra.mxu0 0
        %719 = vmatprep.subr.bf16.mxu0 0
        %720 = vmatpush1.bf16.msra.mxu0 0
        %721 = vmatprep.subr.bf16.mxu0 0
        %722 = vmatpush1.bf16.msra.mxu0 0
        %723 = vmatprep.subr.bf16.mxu0 0
        %724 = vmatpush1.bf16.msra.mxu0 0
        %725 = vmatprep.subr.bf16.mxu0 0
        %726 = vmatpush1.bf16.msra.mxu0 0
        %727 = vmatprep.mubr.bf16.mxu0 0
        %728 = vmatmul.mubr.bf16.gmra.mrb[0].mxu0 %v693
        %v729 = vpop.f32.mrb[0].mxu0
        %v730 = vadd.f32 %v690, %v729
        %v731 = vpop.f32.mrb[0].mxu0
        %v732 = vpop.f32.mrb[0].mxu0
        %v733 = vpop.f32.mrb[0].mxu0
        %734 = vdwg.mxu0
        %735 = vst [vmem:[%s376] sm:$0xf] %v730
        %s736 = sand.u32 %s225, 1
        %s737 = scalar_lea.sflag [#allocation4], %s736
        %s738 = sand.u32 %s225, 1
        %s739 = smul.addr %s738, 4
        %s740 = scalar_lea.vmem [#allocation3], %s739
        // Predicated region
        $region95: #{tpu_custom_call.1} parent=89 // pred_check
          %p741 = pneg %p235
        $region96: #{tpu_custom_call.1} parent=89 // pred_check_branch
          %743 = sbr.rel (%p741) target = $region98
        $region97: #{tpu_custom_call.1} parent=89 // pred_region
          %s745 = ssub.s32 64, 64
          %746 = vsyncadd %s737, %s745
          %s747 = smul.addr %s23, 64
          %s748 = scalar_lea.hbm %s9, %s747
          %s750 = sshll.u32 %s740, 4
          %s751 = int_to_ptr.vmem [resolvable:$true] %s750
          %753 = dma.vmem_to_hbm [thread:$0]  %s751, 64, %s748, %s737
        $region98: #{tpu_custom_call.1} parent=89 // pred_fallthru
          _
      $region90: #{tpu_custom_call.1} parent=5 // pred_fallthru
        _
      %p754 = scmp.le.s32.totalorder 2, %s18
      // Predicated region
      $region99: #{tpu_custom_call.1} parent=5 // pred_check
        %p755 = pneg %p754
      $region100: #{tpu_custom_call.1} parent=5 // pred_check_branch
        %757 = sbr.rel (%p755) target = $region102
      $region101: #{tpu_custom_call.1} parent=5 // pred_region
        %s758 = ssub.s32 %s18, 2
        // Predicated region
        $region103: #{tpu_custom_call.1} parent=101 // pred_check
          %p759 = pneg %p241
        $region104: #{tpu_custom_call.1} parent=101 // pred_check_branch
          %761 = sbr.rel (%p759) target = $region106
        $region105: #{tpu_custom_call.1} parent=101 // pred_region
          %s762 = sand.u32 %s226, 1
          %s763 = scalar_lea.sflag [#allocation4], %s762
          %s764 = sand.u32 %s226, 1
          %s765 = smul.addr %s764, 4
          %s766 = scalar_lea.vmem [#allocation3], %s765
          %767 = dma.done %s763, 64
        $region106: #{tpu_custom_call.1} parent=101 // pred_fallthru
          _
      $region102: #{tpu_custom_call.1} parent=5 // pred_fallthru
        _
    $region6: #{tpu_custom_call.1} parent=1 // loop_footer
      %s22 = sadd.s32 1, %s18
    $region7: #{tpu_custom_call.1} parent=1 // loop_footer_branch
      %17 = sbr.rel target = $region3
    $region8: #{tpu_custom_call.1} parent=1 // loop_exit
      _
    %768 = vsyncpa [#allocation4], 1
    %s769 = scalar_lea.sflag [#allocation4], 1
    %770 = vsyncpa %s769, 1

</llo_original>
